<compile_context>
chip_gen: v6e
topology: v6e:2x2x1
jax: 0.10.0
libtpu: 0.0.40
codegen_flags: <defaults>
</compile_context>

<pallas_src>
import functools

import jax
import jax.numpy as jnp
from jax.experimental import pallas as pl
from jax.experimental.pallas import tpu as pltpu


# ----------------------------- kernel 1 ------------------------------------
def _conf_acc_kernel(logits_ref, labels_ref, ca_ref):
    # logits_ref: (TILE_N, C) native layout, labels_ref: (1, TILE_N) int32,
    # ca_ref: (2, TILE_N) f32 -> row 0 = confidence, row 1 = accuracy.
    #
    # Transpose BEFORE the f32 cast (halves relayout traffic for bf16 inputs).
    # TODO(synk): if a bundle dump ever shows the XLU relayout binding, switch
    # to pltpu.einshape("nc->cn", ...) for the layout-aware minor-dim swap.
    xt = jnp.transpose(logits_ref[...]).astype(jnp.float32)      # (C, TILE_N)
    C = xt.shape[0]

    m = jnp.max(xt, axis=0, keepdims=True)                        # (1, TILE_N)
    sum_exp = jnp.sum(jnp.exp(xt - m), axis=0, keepdims=True)     # (1, TILE_N)
    # max softmax prob = exp(m - m) / sum_exp = 1 / sum_exp; exact divide for
    # parity with the PyTorch softmax-max (EUP is nowhere near the bottleneck).
    conf = 1.0 / sum_exp

    # prediction = first index achieving the max logit (torch.max tie-break)
    iota = jax.lax.broadcasted_iota(jnp.int32, xt.shape, 0)       # (C, TILE_N)
    pred = jnp.min(jnp.where(xt == m, iota, C), axis=0, keepdims=True)
    acc = (pred == labels_ref[...]).astype(jnp.float32)

    # Two row stores instead of a concatenate (no (2, TILE_N) temp / relayout).
    ca_ref[0:1, :] = conf
    ca_ref[1:2, :] = acc


# ----------------------------- kernel 2 ------------------------------------
def _ece_kernel(ca_ref, lo_ref, hi_ref, out_ref, sums_ref, *, n_valid, tile_n):
    i = pl.program_id(0)

    @pl.when(i == 0)
    def _init():
        sums_ref[...] = jnp.zeros_like(sums_ref)

    ca = ca_ref[...]                                              # (2, TILE_N)
    conf = ca[0:1, :]
    acc = ca[1:2, :]
    # Bin edges are only 2*n_bins floats with a constant index_map; kept as
    # resident VMEM blocks (kernel 2 normally runs a single grid step now).
    lo = lo_ref[...]                                              # (B, 1)
    hi = hi_ref[...]                                              # (B, 1)

    # Mask the padded tail of the last tile (global sample index >= n_valid).
    idx = i * tile_n + jax.lax.broadcasted_iota(jnp.int32, (1, tile_n), 1)
    valid = idx < n_valid
    conf_m = jnp.where(valid, conf, -1.0)   # -1 falls in no bin (strict > lower edge)
    acc_m = jnp.where(valid, acc, 0.0)
    ones = valid.astype(jnp.float32)

    # Same .gt()/.le() semantics as the PyTorch reference (lowest-confidence
    # sample is excluded from the first bin, matching the reference exactly).
    in_bin = jnp.logical_and(conf_m > lo, conf_m <= hi)           # (B, TILE_N)
    inb = in_bin.astype(jnp.float32)

    # One small MXU matmul -> per-bin partial [count, sum(conf), sum(acc)].
    stacked = jnp.concatenate([ones, conf_m, acc_m], axis=0)      # (3, TILE_N)
    partial = jax.lax.dot_general(
        inb, stacked,
        dimension_numbers=(((1,), (1,)), ((), ())),               # contract over TILE_N
        preferred_element_type=jnp.float32)                       # (B, 3)
    sums_ref[...] += partial

    @pl.when(i == pl.num_programs(0) - 1)
    def _finalize():
        cnt = sums_ref[:, 0:1]
        s_conf = sums_ref[:, 1:2]
        s_acc = sums_ref[:, 2:3]
        prop = cnt * jnp.float32(1.0 / n_valid)
        safe = jnp.maximum(cnt, 1.0)
        term = jnp.abs(s_conf - s_acc) / safe * prop
        term = jnp.where(cnt > 0.0, term, 0.0)                    # skip empty bins
        out_ref[0, 0] = jnp.sum(term)


# ----------------------------- tiling helpers --------------------------------
def _round_up(x, m):
    return ((x + m - 1) // m) * m


def _vmem_capacity_bytes():
    # Per-generation VMEM: ~128 MiB on v5e/v6e, 64 MiB per TC on v7x.
    try:
        return int(pltpu.get_tpu_info().vmem_capacity_bytes)
    except Exception:
        return 64 << 20   # conservative fallback (v7x per-TC VMEM)


def _pick_tile_n_conf(n, c, in_itemsize, buf_budget_bytes):
    """C-aware tile for kernel 1, sized from a per-generation VMEM budget."""
    c_lane = max(_round_up(c, 128), 128)   # input block lane padding
    c_sub = max(_round_up(c, 8), 8)        # transposed f32 temps (sublane padding)
    per_sample = (2 * c_lane * in_itemsize   # input block, double-buffered
                  + 2 * c_sub * 4            # transposed copy + exp temp (f32)
                  + 2 * 2 * 4)               # packed (2, tile) output, double-buffered
    tile = (buf_budget_bytes // per_sample) // 128 * 128
    tile = max(128, min(tile, 8192))
    return min(tile, _round_up(n, 128))


def _pick_tile_n_ece(n):
    """Kernel 2 moves only 8 bytes/sample: one grid step up to 32K samples."""
    return min(_round_up(n, 128), 32768)


# ----------------------------- wrapper --------------------------------------
def adaptive_ece(logits, labels, n_bins: int = 15, tile_n=None, tile_n_ece=None):
    """logits: (N, C) float, labels: (N,) int — mirrors AdaptiveECELoss.forward."""
    N, C = logits.shape

    vmem_cap = _vmem_capacity_bytes()
    # Larger per-buffer budget on 128 MiB parts (v5e/v6e), tighter on v7x.
    buf_budget = (8 << 20) if vmem_cap >= (100 << 20) else (4 << 20)
    vmem_limit = min(int(vmem_cap * 3 // 4), 96 << 20)

    if tile_n is None:
        tile_n = _pick_tile_n_conf(N, C, jnp.dtype(logits.dtype).itemsize, buf_budget)
    if tile_n_ece is None:
        tile_n_ece = _pick_tile_n_ece(N)

    grid_n = pl.cdiv(N, tile_n)
    labels_2d = labels.astype(jnp.int32).reshape(1, N)

    # --- kernel 1: per-sample max-softmax confidence + accuracy ---------------
    # Garbage in the padded tail of the last input block only affects output
    # columns that Pallas clips on writeback (ca is exactly (2, N) in HBM), so
    # the sort below and kernel 2 only ever see the N valid samples.
    ca = pl.pallas_call(
        _conf_acc_kernel,
        out_shape=jax.ShapeDtypeStruct((2, N), jnp.float32),
        grid=(grid_n,),
        in_specs=[
            pl.BlockSpec((tile_n, C), lambda i: (i, 0)),   # native (N, C) layout
            pl.BlockSpec((1, tile_n), lambda i: (0, i)),
        ],
        out_specs=pl.BlockSpec((2, tile_n), lambda i: (0, i)),
        compiler_params=pltpu.CompilerParams(
            dimension_semantics=("parallel",),             # 2x on v7x megacore
            vmem_limit_bytes=vmem_limit),
    )(logits, labels_2d)

    conf_flat = ca[0, :]

    # --- equal-count bin edges (histedges_equalN): sort + linear interpolation --
    # TODO(synk): sorting has no clean Pallas TPU equivalent; kept as plain-JAX glue.
    sorted_conf = jnp.sort(conf_flat)
    positions = jnp.linspace(0.0, float(N), n_bins + 1)
    edges = jnp.interp(positions, jnp.arange(N, dtype=jnp.float32), sorted_conf)
    bin_lowers = edges[:-1].reshape(n_bins, 1).astype(jnp.float32)
    bin_uppers = edges[1:].reshape(n_bins, 1).astype(jnp.float32)

    # --- kernel 2: per-bin accumulation -> scalar ECE --------------------------
    grid_ece = pl.cdiv(N, tile_n_ece)
    ece = pl.pallas_call(
        functools.partial(_ece_kernel, n_valid=N, tile_n=tile_n_ece),
        out_shape=jax.ShapeDtypeStruct((1, 1), jnp.float32),
        grid=(grid_ece,),
        in_specs=[
            pl.BlockSpec((2, tile_n_ece), lambda i: (0, i)),
            pl.BlockSpec((n_bins, 1), lambda i: (0, 0)),
            pl.BlockSpec((n_bins, 1), lambda i: (0, 0)),
        ],
        out_specs=pl.BlockSpec((1, 1), lambda i: (0, 0)),
        scratch_shapes=[pltpu.VMEM((n_bins, 3), jnp.float32)],
        compiler_params=pltpu.CompilerParams(
            dimension_semantics=("arbitrary",),
            vmem_limit_bytes=vmem_limit),
    )(ca, bin_lowers, bin_uppers)

    return ece.reshape(1)   # matches torch.zeros(1) result shape


# ----------------------------- pure-JAX reference ----------------------------
def _adaptive_ece_ref(logits, labels, n_bins=15):
    probs = jax.nn.softmax(logits.astype(jnp.float32), axis=1)
    conf = jnp.max(probs, axis=1)
    pred = jnp.argmax(probs, axis=1)
    acc = (pred == labels).astype(jnp.float32)
    n = logits.shape[0]
    sorted_conf = jnp.sort(conf)
    positions = jnp.linspace(0.0, float(n), n_bins + 1)
    edges = jnp.interp(positions, jnp.arange(n, dtype=jnp.float32), sorted_conf)
    ece = jnp.zeros((), jnp.float32)
    for b in range(n_bins):
        lo, hi = edges[b], edges[b + 1]
        in_bin = jnp.logical_and(conf > lo, conf <= hi)
        cnt = jnp.sum(in_bin.astype(jnp.float32))
        prop = cnt / n
        safe = jnp.maximum(cnt, 1.0)
        acc_in = jnp.sum(jnp.where(in_bin, acc, 0.0)) / safe
        conf_in = jnp.sum(jnp.where(in_bin, conf, 0.0)) / safe
        ece = ece + jnp.where(cnt > 0.0, jnp.abs(conf_in - acc_in) * prop, 0.0)
    return ece.reshape(1)


# ----------------------------- main ------------------------------------------
if __name__ == "__main__":
    # Small shapes; N deliberately NOT a multiple of the forced tile below so
    # both the single-step production path and the multi-tile + masked-tail
    # paths get exercised.
    N, C, n_bins = 600, 16, 15
    key = jax.random.PRNGKey(0)
    k1, k2 = jax.random.split(key)
    logits = jax.random.normal(k1, (N, C), dtype=jnp.float32) * 2.0
    labels = jax.random.randint(k2, (N,), 0, C, dtype=jnp.int32)

    ref = _adaptive_ece_ref(logits, labels, n_bins=n_bins)

    # Production path: auto-sized tiles (single grid step for these shapes).
    ece = adaptive_ece(logits, labels, n_bins=n_bins)
    jax.block_until_ready(ece)
    assert jnp.allclose(ece, ref, atol=5e-3), (ece, ref)

    # Forced-small-tile path: multiple grid steps + partial tail masking.
    ece_tiled = adaptive_ece(logits, labels, n_bins=n_bins, tile_n=256, tile_n_ece=256)
    jax.block_until_ready(ece_tiled)
    assert jnp.allclose(ece_tiled, ref, atol=5e-3), (ece_tiled, ref)

    print("KERNEL_OK")
</pallas_src>

<mosaic_0001>
module attributes {stable_mosaic.version = 11 : i64} {
  func.func @_conf_acc_kernel(%arg0: i32, %arg1: memref<640x16xf32, #tpu.memory_space<vmem>>, %arg2: memref<1x640xi32, #tpu.memory_space<vmem>>, %arg3: memref<2x640xf32, #tpu.memory_space<vmem>>) attributes {dimension_semantics = [#tpu.dimension_semantics<parallel>], iteration_bounds = array<i64: 1>, scalar_prefetch = 0 : i64, scratch_operands = 0 : i64, tpu.core_type = #tpu.core_type<tc>, window_params = [{transform_indices = @transform_0, window_bounds = array<i64: 640, 16>}, {transform_indices = @transform_1, window_bounds = array<i64: 1, 640>}, {transform_indices = @transform_2, window_bounds = array<i64: 2, 640>}]} {
    %c0 = arith.constant 0 : index
    %c0_0 = arith.constant 0 : index
    %0 = vector.load %arg1[%c0, %c0_0] : memref<640x16xf32, #tpu.memory_space<vmem>>, vector<640x16xf32>
    %1 = tpu.transpose %0, [1, 0] : vector<640x16xf32> -> vector<16x640xf32>
    %cst = arith.constant dense<0xFF800000> : vector<640xf32>
    %2 = vector.multi_reduction <maximumf>, %1, %cst [0] : vector<16x640xf32> to vector<640xf32>
    %3 = vector.shape_cast %2 : vector<640xf32> to vector<1x640xf32>
    %4 = vector.broadcast %3 : vector<1x640xf32> to vector<16x640xf32>
    %5 = arith.subf %1, %4 : vector<16x640xf32>
    %6 = math.exp %5 : vector<16x640xf32>
    %cst_1 = arith.constant dense<0.000000e+00> : vector<640xf32>
    %7 = vector.multi_reduction <add>, %6, %cst_1 [0] : vector<16x640xf32> to vector<640xf32>
    %8 = vector.shape_cast %7 : vector<640xf32> to vector<1x640xf32>
    %cst_2 = arith.constant 1.000000e+00 : f32
    %9 = vector.broadcast %cst_2 : f32 to vector<1x640xf32>
    %10 = arith.divf %9, %8 : vector<1x640xf32>
    %11 = tpu.iota {dimensions = array<i32: 0>} : vector<16x640xi32>
    %12 = vector.broadcast %3 : vector<1x640xf32> to vector<16x640xf32>
    %13 = arith.cmpf oeq, %1, %12 : vector<16x640xf32>
    %c16_i32 = arith.constant 16 : i32
    %14 = vector.broadcast %c16_i32 : i32 to vector<16x640xi32>
    %15 = arith.select %13, %11, %14 : vector<16x640xi1>, vector<16x640xi32>
    %cst_3 = arith.constant dense<2147483647> : vector<640xi32>
    %16 = vector.multi_reduction <minsi>, %15, %cst_3 [0] : vector<16x640xi32> to vector<640xi32>
    %17 = vector.shape_cast %16 : vector<640xi32> to vector<1x640xi32>
    %c0_4 = arith.constant 0 : index
    %c0_5 = arith.constant 0 : index
    %18 = vector.load %arg2[%c0_4, %c0_5] : memref<1x640xi32, #tpu.memory_space<vmem>>, vector<1x640xi32>
    %19 = arith.cmpi eq, %17, %18 : vector<1x640xi32>
    %20 = arith.extui %19 : vector<1x640xi1> to vector<1x640xi32>
    %21 = arith.sitofp %20 : vector<1x640xi32> to vector<1x640xf32>
    %c0_6 = arith.constant 0 : index
    %c0_7 = arith.constant 0 : index
    %22 = vector.load %arg3[%c0_6, %c0_7] : memref<2x640xf32, #tpu.memory_space<vmem>>, vector<1x640xf32>
    tpu.vector_store %arg3[%c0_6, %c0_7], %10 {strides = array<i32>} : memref<2x640xf32, #tpu.memory_space<vmem>>, vector<1x640xf32>,
    %c1 = arith.constant 1 : index
    %c0_8 = arith.constant 0 : index
    %23 = vector.load %arg3[%c1, %c0_8] : memref<2x640xf32, #tpu.memory_space<vmem>>, vector<1x640xf32>
    tpu.vector_store %arg3[%c1, %c0_8], %21 {strides = array<i32>} : memref<2x640xf32, #tpu.memory_space<vmem>>, vector<1x640xf32>,
    return
  }
  func.func @transform_0(%arg0: i32) -> (i32, i32) {
    %c0_i32 = arith.constant 0 : i32
    %c0_i32_0 = arith.constant 0 : i32
    return %arg0, %c0_i32 : i32, i32
  }
  func.func @transform_1(%arg0: i32) -> (i32, i32) {
    %c0_i32 = arith.constant 0 : i32
    %c0_i32_0 = arith.constant 0 : i32
    return %c0_i32, %arg0 : i32, i32
  }
  func.func @transform_2(%arg0: i32) -> (i32, i32) {
    %c0_i32 = arith.constant 0 : i32
    %c0_i32_0 = arith.constant 0 : i32
    return %c0_i32, %arg0 : i32, i32
  }
}

</mosaic_0001>

<llo_original>
// kernel: tpu_custom_call.1
$region0: #{tpu_custom_call.1}
  #allocation0 [shape = 'u32[]', space=smem, size = 0x4, offset = 0x4, fixed_abs, tag = 'smem constant byte address 0x4 - core index']
  #allocation1 [shape = 'u32[144,128]{1,0:T(1,128)}', space=vmem, size = 0x12000, scoped, tag = 'internal scratch']
  %s0 = inlined_call_operand.vmem [shape: f32[600,16], index: 0, kind: input, shape index: {}]
  %s1 = inlined_call_operand.vmem [shape: s32[1,600], index: 1, kind: input, shape index: {}]
  %s2 = inlined_call_operand.hbm [shape: f32[2,600], index: 2, kind: output, shape index: {}]
  %s3 = sld [smem:[#allocation0]]
  $region18: #{tpu_custom_call.1} parent=0
    _
  %s5 = ssub.s32 1, %s3
  %s6 = scalar_select 0, %s5, %s3
  $region1: #{tpu_custom_call.1} parent=0
    #allocation2 [shape = 'u8[5120]{0}', space=vmem, size = 0x1400, scoped, tag = 'output window, operand 0, single buffered']
    #allocation3 [shape = 's32[1]{0}', space=sflag, size = 0x4, scoped, tag = 'scoped memory for tpu_custom_call.1']
    %7 = vsyncpa [#allocation3], 0
    // Predicated region
    $region2: #{tpu_custom_call.1} parent=1 // pred_check
      _
    $region3: #{tpu_custom_call.1} parent=1 // pred_check_branch
      %9 = sbr.rel (0) target = $region5
    $region4: #{tpu_custom_call.1} parent=1 // pred_region
      _
    $region5: #{tpu_custom_call.1} parent=1 // pred_fallthru
      _
    // Predicated region
    $region6: #{tpu_custom_call.1} parent=1 // pred_check
      _
    $region7: #{tpu_custom_call.1} parent=1 // pred_check_branch
      %11 = sbr.rel (0) target = $region9
    $region8: #{tpu_custom_call.1} parent=1 // pred_region
      _
    $region9: #{tpu_custom_call.1} parent=1 // pred_fallthru
      _
    %v12 = vld [vmem:[%s0] sm:$0xff]
    %v13 = vld [vmem:[%s0 + $0x8] sm:$0xff]
    %v14 = vld [vmem:[%s0 + $0x10] sm:$0xff]
    %v15 = vld [vmem:[%s0 + $0x18] sm:$0xff]
    %v16 = vld [vmem:[%s0 + $0x20] sm:$0xff]
    %v17 = vld [vmem:[%s0 + $0x28] sm:$0xff]
    %v18 = vld [vmem:[%s0 + $0x30] sm:$0xff]
    %v19 = vld [vmem:[%s0 + $0x38] sm:$0xff]
    %v20 = vld [vmem:[%s0 + $0x40] sm:$0xff]
    %v21 = vld [vmem:[%s0 + $0x48] sm:$0xff]
    %v22 = vld [vmem:[%s0 + $0x50] sm:$0xff]
    %v23 = vld [vmem:[%s0 + $0x58] sm:$0xff]
    %v24 = vld [vmem:[%s0 + $0x60] sm:$0xff]
    %v25 = vld [vmem:[%s0 + $0x68] sm:$0xff]
    %v26 = vld [vmem:[%s0 + $0x70] sm:$0xff]
    %v27 = vld [vmem:[%s0 + $0x78] sm:$0xff]
    %v28 = vld [vmem:[%s0 + $0x80] sm:$0xff]
    %v29 = vld [vmem:[%s0 + $0x88] sm:$0xff]
    %v30 = vld [vmem:[%s0 + $0x90] sm:$0xff]
    %v31 = vld [vmem:[%s0 + $0x98] sm:$0xff]
    %v32 = vld [vmem:[%s0 + $0xa0] sm:$0xff]
    %v33 = vld [vmem:[%s0 + $0xa8] sm:$0xff]
    %v34 = vld [vmem:[%s0 + $0xb0] sm:$0xff]
    %v35 = vld [vmem:[%s0 + $0xb8] sm:$0xff]
    %v36 = vld [vmem:[%s0 + $0xc0] sm:$0xff]
    %v37 = vld [vmem:[%s0 + $0xc8] sm:$0xff]
    %v38 = vld [vmem:[%s0 + $0xd0] sm:$0xff]
    %v39 = vld [vmem:[%s0 + $0xd8] sm:$0xff]
    %v40 = vld [vmem:[%s0 + $0xe0] sm:$0xff]
    %v41 = vld [vmem:[%s0 + $0xe8] sm:$0xff]
    %v42 = vld [vmem:[%s0 + $0xf0] sm:$0xff]
    %v43 = vld [vmem:[%s0 + $0xf8] sm:$0xff]
    %v44 = vld [vmem:[%s0 + $0x100] sm:$0xff]
    %v45 = vld [vmem:[%s0 + $0x108] sm:$0xff]
    %v46 = vld [vmem:[%s0 + $0x110] sm:$0xff]
    %v47 = vld [vmem:[%s0 + $0x118] sm:$0xff]
    %v48 = vld [vmem:[%s0 + $0x120] sm:$0xff]
    %v49 = vld [vmem:[%s0 + $0x128] sm:$0xff]
    %v50 = vld [vmem:[%s0 + $0x130] sm:$0xff]
    %v51 = vld [vmem:[%s0 + $0x138] sm:$0xff]
    %v52 = vld [vmem:[%s0 + $0x140] sm:$0xff]
    %v53 = vld [vmem:[%s0 + $0x148] sm:$0xff]
    %v54 = vld [vmem:[%s0 + $0x150] sm:$0xff]
    %v55 = vld [vmem:[%s0 + $0x158] sm:$0xff]
    %v56 = vld [vmem:[%s0 + $0x160] sm:$0xff]
    %v57 = vld [vmem:[%s0 + $0x168] sm:$0xff]
    %v58 = vld [vmem:[%s0 + $0x170] sm:$0xff]
    %v59 = vld [vmem:[%s0 + $0x178] sm:$0xff]
    %v60 = vld [vmem:[%s0 + $0x180] sm:$0xff]
    %v61 = vld [vmem:[%s0 + $0x188] sm:$0xff]
    %v62 = vld [vmem:[%s0 + $0x190] sm:$0xff]
    %v63 = vld [vmem:[%s0 + $0x198] sm:$0xff]
    %v64 = vld [vmem:[%s0 + $0x1a0] sm:$0xff]
    %v65 = vld [vmem:[%s0 + $0x1a8] sm:$0xff]
    %v66 = vld [vmem:[%s0 + $0x1b0] sm:$0xff]
    %v67 = vld [vmem:[%s0 + $0x1b8] sm:$0xff]
    %v68 = vld [vmem:[%s0 + $0x1c0] sm:$0xff]
    %v69 = vld [vmem:[%s0 + $0x1c8] sm:$0xff]
    %v70 = vld [vmem:[%s0 + $0x1d0] sm:$0xff]
    %v71 = vld [vmem:[%s0 + $0x1d8] sm:$0xff]
    %v72 = vld [vmem:[%s0 + $0x1e0] sm:$0xff]
    %v73 = vld [vmem:[%s0 + $0x1e8] sm:$0xff]
    %v74 = vld [vmem:[%s0 + $0x1f0] sm:$0xff]
    %v75 = vld [vmem:[%s0 + $0x1f8] sm:$0xff]
    %v76 = vld [vmem:[%s0 + $0x200] sm:$0xff]
    %v77 = vld [vmem:[%s0 + $0x208] sm:$0xff]
    %v78 = vld [vmem:[%s0 + $0x210] sm:$0xff]
    %v79 = vld [vmem:[%s0 + $0x218] sm:$0xff]
    %v80 = vld [vmem:[%s0 + $0x220] sm:$0xff]
    %v81 = vld [vmem:[%s0 + $0x228] sm:$0xff]
    %v82 = vld [vmem:[%s0 + $0x230] sm:$0xff]
    %v83 = vld [vmem:[%s0 + $0x238] sm:$0xff]
    %v84 = vld [vmem:[%s0 + $0x240] sm:$0xff]
    %v85 = vld [vmem:[%s0 + $0x248] sm:$0xff]
    %v86 = vld [vmem:[%s0 + $0x250] sm:$0xff]
    %v87 = vld [vmem:[%s0 + $0x258] sm:$0xff]
    %v88 = vld [vmem:[%s0 + $0x260] sm:$0xff]
    %v89 = vld [vmem:[%s0 + $0x268] sm:$0xff]
    %v90 = vld [vmem:[%s0 + $0x270] sm:$0xff]
    %v91 = vld [vmem:[%s0 + $0x278] sm:$0xff]
    %92 = vxpose.xlu0.b32.start [1/16] %v12, 128
    %93 = vxpose.xlu0.b32.cont [2/16] %v13, 128
    %94 = vxpose.xlu0.b32.cont [3/16] %v14, 128
    %95 = vxpose.xlu0.b32.cont [4/16] %v15, 128
    %96 = vxpose.xlu0.b32.cont [5/16] %v16, 128
    %97 = vxpose.xlu0.b32.cont [6/16] %v17, 128
    %98 = vxpose.xlu0.b32.cont [7/16] %v18, 128
    %99 = vxpose.xlu0.b32.cont [8/16] %v19, 128
    %100 = vxpose.xlu0.b32.cont [9/16] %v20, 128
    %101 = vxpose.xlu0.b32.cont [10/16] %v21, 128
    %102 = vxpose.xlu0.b32.cont [11/16] %v22, 128
    %103 = vxpose.xlu0.b32.cont [12/16] %v23, 128
    %104 = vxpose.xlu0.b32.cont [13/16] %v24, 128
    %105 = vxpose.xlu0.b32.cont [14/16] %v25, 128
    %106 = vxpose.xlu0.b32.cont [15/16] %v26, 128
    %107 = vxpose.xlu0.b32.end [16/16] %v27, 128
    %v108 = vpop.trf.xlu0
    %v109 = vpop.trf.xlu0
    %v110 = vpop.trf.xlu0
    %v111 = vpop.trf.xlu0
    %v112 = vpop.trf.xlu0
    %v113 = vpop.trf.xlu0
    %v114 = vpop.trf.xlu0
    %v115 = vpop.trf.xlu0
    %v116 = vpop.trf.xlu0
    %v117 = vpop.trf.xlu0
    %v118 = vpop.trf.xlu0
    %v119 = vpop.trf.xlu0
    %v120 = vpop.trf.xlu0
    %v121 = vpop.trf.xlu0
    %v122 = vpop.trf.xlu0
    %v123 = vpop.trf.xlu0
    %124 = vxpose.xlu0.b32.start [1/16] %v28, 128
    %125 = vxpose.xlu0.b32.cont [2/16] %v29, 128
    %126 = vxpose.xlu0.b32.cont [3/16] %v30, 128
    %127 = vxpose.xlu0.b32.cont [4/16] %v31, 128
    %128 = vxpose.xlu0.b32.cont [5/16] %v32, 128
    %129 = vxpose.xlu0.b32.cont [6/16] %v33, 128
    %130 = vxpose.xlu0.b32.cont [7/16] %v34, 128
    %131 = vxpose.xlu0.b32.cont [8/16] %v35, 128
    %132 = vxpose.xlu0.b32.cont [9/16] %v36, 128
    %133 = vxpose.xlu0.b32.cont [10/16] %v37, 128
    %134 = vxpose.xlu0.b32.cont [11/16] %v38, 128
    %135 = vxpose.xlu0.b32.cont [12/16] %v39, 128
    %136 = vxpose.xlu0.b32.cont [13/16] %v40, 128
    %137 = vxpose.xlu0.b32.cont [14/16] %v41, 128
    %138 = vxpose.xlu0.b32.cont [15/16] %v42, 128
    %139 = vxpose.xlu0.b32.end [16/16] %v43, 128
    %v140 = vpop.trf.xlu0
    %v141 = vpop.trf.xlu0
    %v142 = vpop.trf.xlu0
    %v143 = vpop.trf.xlu0
    %v144 = vpop.trf.xlu0
    %v145 = vpop.trf.xlu0
    %v146 = vpop.trf.xlu0
    %v147 = vpop.trf.xlu0
    %v148 = vpop.trf.xlu0
    %v149 = vpop.trf.xlu0
    %v150 = vpop.trf.xlu0
    %v151 = vpop.trf.xlu0
    %v152 = vpop.trf.xlu0
    %v153 = vpop.trf.xlu0
    %v154 = vpop.trf.xlu0
    %v155 = vpop.trf.xlu0
    %156 = vxpose.xlu0.b32.start [1/16] %v44, 128
    %157 = vxpose.xlu0.b32.cont [2/16] %v45, 128
    %158 = vxpose.xlu0.b32.cont [3/16] %v46, 128
    %159 = vxpose.xlu0.b32.cont [4/16] %v47, 128
    %160 = vxpose.xlu0.b32.cont [5/16] %v48, 128
    %161 = vxpose.xlu0.b32.cont [6/16] %v49, 128
    %162 = vxpose.xlu0.b32.cont [7/16] %v50, 128
    %163 = vxpose.xlu0.b32.cont [8/16] %v51, 128
    %164 = vxpose.xlu0.b32.cont [9/16] %v52, 128
    %165 = vxpose.xlu0.b32.cont [10/16] %v53, 128
    %166 = vxpose.xlu0.b32.cont [11/16] %v54, 128
    %167 = vxpose.xlu0.b32.cont [12/16] %v55, 128
    %168 = vxpose.xlu0.b32.cont [13/16] %v56, 128
    %169 = vxpose.xlu0.b32.cont [14/16] %v57, 128
    %170 = vxpose.xlu0.b32.cont [15/16] %v58, 128
    %171 = vxpose.xlu0.b32.end [16/16] %v59, 128
    %v172 = vpop.trf.xlu0
    %v173 = vpop.trf.xlu0
    %v174 = vpop.trf.xlu0
    %v175 = vpop.trf.xlu0
    %v176 = vpop.trf.xlu0
    %v177 = vpop.trf.xlu0
    %v178 = vpop.trf.xlu0
    %v179 = vpop.trf.xlu0
    %v180 = vpop.trf.xlu0
    %v181 = vpop.trf.xlu0
    %v182 = vpop.trf.xlu0
    %v183 = vpop.trf.xlu0
    %v184 = vpop.trf.xlu0
    %v185 = vpop.trf.xlu0
    %v186 = vpop.trf.xlu0
    %v187 = vpop.trf.xlu0
    %188 = vxpose.xlu0.b32.start [1/16] %v60, 128
    %189 = vxpose.xlu0.b32.cont [2/16] %v61, 128
    %190 = vxpose.xlu0.b32.cont [3/16] %v62, 128
    %191 = vxpose.xlu0.b32.cont [4/16] %v63, 128
    %192 = vxpose.xlu0.b32.cont [5/16] %v64, 128
    %193 = vxpose.xlu0.b32.cont [6/16] %v65, 128
    %194 = vxpose.xlu0.b32.cont [7/16] %v66, 128
    %195 = vxpose.xlu0.b32.cont [8/16] %v67, 128
    %196 = vxpose.xlu0.b32.cont [9/16] %v68, 128
    %197 = vxpose.xlu0.b32.cont [10/16] %v69, 128
    %198 = vxpose.xlu0.b32.cont [11/16] %v70, 128
    %199 = vxpose.xlu0.b32.cont [12/16] %v71, 128
    %200 = vxpose.xlu0.b32.cont [13/16] %v72, 128
    %201 = vxpose.xlu0.b32.cont [14/16] %v73, 128
    %202 = vxpose.xlu0.b32.cont [15/16] %v74, 128
    %203 = vxpose.xlu0.b32.end [16/16] %v75, 128
    %v204 = vpop.trf.xlu0
    %v205 = vpop.trf.xlu0
    %v206 = vpop.trf.xlu0
    %v207 = vpop.trf.xlu0
    %v208 = vpop.trf.xlu0
    %v209 = vpop.trf.xlu0
    %v210 = vpop.trf.xlu0
    %v211 = vpop.trf.xlu0
    %v212 = vpop.trf.xlu0
    %v213 = vpop.trf.xlu0
    %v214 = vpop.trf.xlu0
    %v215 = vpop.trf.xlu0
    %v216 = vpop.trf.xlu0
    %v217 = vpop.trf.xlu0
    %v218 = vpop.trf.xlu0
    %v219 = vpop.trf.xlu0
    %220 = vxpose.xlu0.b32.start [1/16] %v76, 128
    %221 = vxpose.xlu0.b32.cont [2/16] %v77, 128
    %222 = vxpose.xlu0.b32.cont [3/16] %v78, 128
    %223 = vxpose.xlu0.b32.cont [4/16] %v79, 128
    %224 = vxpose.xlu0.b32.cont [5/16] %v80, 128
    %225 = vxpose.xlu0.b32.cont [6/16] %v81, 128
    %226 = vxpose.xlu0.b32.cont [7/16] %v82, 128
    %227 = vxpose.xlu0.b32.cont [8/16] %v83, 128
    %228 = vxpose.xlu0.b32.cont [9/16] %v84, 128
    %229 = vxpose.xlu0.b32.cont [10/16] %v85, 128
    %230 = vxpose.xlu0.b32.cont [11/16] %v86, 128
    %231 = vxpose.xlu0.b32.cont [12/16] %v87, 128
    %232 = vxpose.xlu0.b32.cont [13/16] %v88, 128
    %233 = vxpose.xlu0.b32.cont [14/16] %v89, 128
    %234 = vxpose.xlu0.b32.cont [15/16] %v90, 128
    %235 = vxpose.xlu0.b32.end [16/16] %v91, 128
    %v236 = vpop.trf.xlu0
    %v237 = vpop.trf.xlu0
    %v238 = vpop.trf.xlu0
    %v239 = vpop.trf.xlu0
    %v240 = vpop.trf.xlu0
    %v241 = vpop.trf.xlu0
    %v242 = vpop.trf.xlu0
    %v243 = vpop.trf.xlu0
    %v244 = vpop.trf.xlu0
    %v245 = vpop.trf.xlu0
    %v246 = vpop.trf.xlu0
    %v247 = vpop.trf.xlu0
    %v248 = vpop.trf.xlu0
    %v249 = vpop.trf.xlu0
    %v250 = vpop.trf.xlu0
    %v251 = vpop.trf.xlu0
    %v252 = vmax.f32 %v108, %v109
    %v253 = vrot.slane %v252, 4
    %v254 = vmax.f32 %v252, %v253
    %v255 = vrot.slane %v254, 2
    %v256 = vmax.f32 %v254, %v255
    %v257 = vrot.slane %v256, 1
    %v258 = vmax.f32 %v256, %v257
    %v259 = vmax.f32 %v140, %v141
    %v260 = vrot.slane %v259, 4
    %v261 = vmax.f32 %v259, %v260
    %v262 = vrot.slane %v261, 2
    %v263 = vmax.f32 %v261, %v262
    %v264 = vrot.slane %v263, 1
    %v265 = vmax.f32 %v263, %v264
    %v266 = vmax.f32 %v172, %v173
    %v267 = vrot.slane %v266, 4
    %v268 = vmax.f32 %v266, %v267
    %v269 = vrot.slane %v268, 2
    %v270 = vmax.f32 %v268, %v269
    %v271 = vrot.slane %v270, 1
    %v272 = vmax.f32 %v270, %v271
    %v273 = vmax.f32 %v204, %v205
    %v274 = vrot.slane %v273, 4
    %v275 = vmax.f32 %v273, %v274
    %v276 = vrot.slane %v275, 2
    %v277 = vmax.f32 %v275, %v276
    %v278 = vrot.slane %v277, 1
    %v279 = vmax.f32 %v277, %v278
    %v280 = vmax.f32 %v236, %v237
    %v281 = vrot.slane %v280, 4
    %v282 = vmax.f32 %v280, %v281
    %v283 = vrot.slane %v282, 2
    %v284 = vmax.f32 %v282, %v283
    %v285 = vrot.slane %v284, 1
    %v286 = vmax.f32 %v284, %v285
    %v287 = vsub.f32 %v108, %v258
    %v288 = vsub.f32 %v140, %v265
    %v289 = vsub.f32 %v172, %v272
    %v290 = vsub.f32 %v204, %v279
    %v291 = vsub.f32 %v236, %v286
    %v292 = vsub.f32 %v109, %v258
    %v293 = vsub.f32 %v141, %v265
    %v294 = vsub.f32 %v173, %v272
    %v295 = vsub.f32 %v205, %v279
    %v296 = vsub.f32 %v237, %v286
    %v297 = vmul.f32 %v287, 1.442695
    %v298 = vpow.pop %v297
    %v299 = vmul.f32 %v288, 1.442695
    %v300 = vpow.pop %v299
    %v301 = vmul.f32 %v289, 1.442695
    %v302 = vpow.pop %v301
    %v303 = vmul.f32 %v290, 1.442695
    %v304 = vpow.pop %v303
    %v305 = vmul.f32 %v291, 1.442695
    %v306 = vpow.pop %v305
    %v307 = vmul.f32 %v292, 1.442695
    %v308 = vpow.pop %v307
    %v309 = vmul.f32 %v293, 1.442695
    %v310 = vpow.pop %v309
    %v311 = vmul.f32 %v294, 1.442695
    %v312 = vpow.pop %v311
    %v313 = vmul.f32 %v295, 1.442695
    %v314 = vpow.pop %v313
    %v315 = vmul.f32 %v296, 1.442695
    %v316 = vpow.pop %v315
    %v317 = vadd.f32 %v298, %v308
    %v318 = vrot.slane %v317, 4
    %v319 = vadd.f32 %v317, %v318
    %v320 = vrot.slane %v319, 2
    %v321 = vadd.f32 %v319, %v320
    %v322 = vrot.slane %v321, 1
    %v323 = vadd.f32 %v321, %v322
    %v324 = vadd.f32 %v300, %v310
    %v325 = vrot.slane %v324, 4
    %v326 = vadd.f32 %v324, %v325
    %v327 = vrot.slane %v326, 2
    %v328 = vadd.f32 %v326, %v327
    %v329 = vrot.slane %v328, 1
    %v330 = vadd.f32 %v328, %v329
    %v331 = vadd.f32 %v302, %v312
    %v332 = vrot.slane %v331, 4
    %v333 = vadd.f32 %v331, %v332
    %v334 = vrot.slane %v333, 2
    %v335 = vadd.f32 %v333, %v334
    %v336 = vrot.slane %v335, 1
    %v337 = vadd.f32 %v335, %v336
    %v338 = vadd.f32 %v304, %v314
    %v339 = vrot.slane %v338, 4
    %v340 = vadd.f32 %v338, %v339
    %v341 = vrot.slane %v340, 2
    %v342 = vadd.f32 %v340, %v341
    %v343 = vrot.slane %v342, 1
    %v344 = vadd.f32 %v342, %v343
    %v345 = vadd.f32 %v306, %v316
    %v346 = vrot.slane %v345, 4
    %v347 = vadd.f32 %v345, %v346
    %v348 = vrot.slane %v347, 2
    %v349 = vadd.f32 %v347, %v348
    %v350 = vrot.slane %v349, 1
    %v351 = vadd.f32 %v349, %v350
    %v352 = vrcp.pop %v323
    %v353 = vmul.f32 1.0, %v352
    %v354 = vrcp.pop %v330
    %v355 = vmul.f32 1.0, %v354
    %v356 = vrcp.pop %v337
    %v357 = vmul.f32 1.0, %v356
    %v358 = vrcp.pop %v344
    %v359 = vmul.f32 1.0, %v358
    %v360 = vrcp.pop %v351
    %v361 = vmul.f32 1.0, %v360
    %v362 = vlaneseq
    %v363 = vshrl.u32 %v362, 7
    %v364 = vadd.s32 %v363, 8
    %vm365 = vcmp.eq.f32.partialorder %v108, %v258
    %vm366 = vcmp.eq.f32.partialorder %v140, %v265
    %vm367 = vcmp.eq.f32.partialorder %v172, %v272
    %vm368 = vcmp.eq.f32.partialorder %v204, %v279
    %vm369 = vcmp.eq.f32.partialorder %v236, %v286
    %vm370 = vcmp.eq.f32.partialorder %v109, %v258
    %vm371 = vcmp.eq.f32.partialorder %v141, %v265
    %vm372 = vcmp.eq.f32.partialorder %v173, %v272
    %vm373 = vcmp.eq.f32.partialorder %v205, %v279
    %vm374 = vcmp.eq.f32.partialorder %v237, %v286
    %v375 = vsel %vm365, %v363, 16
    %v376 = vsel %vm366, %v363, 16
    %v377 = vsel %vm367, %v363, 16
    %v378 = vsel %vm368, %v363, 16
    %v379 = vsel %vm369, %v363, 16
    %v380 = vsel %vm370, %v364, 16
    %v381 = vsel %vm371, %v364, 16
    %v382 = vsel %vm372, %v364, 16
    %v383 = vsel %vm373, %v364, 16
    %v384 = vsel %vm374, %v364, 16
    %vm385 = vcmp.lt.s32.totalorder %v375, %v380
    %v386 = vsel %vm385, %v375, %v380
    %v387 = vrot.slane %v386, 4
    %vm388 = vcmp.lt.s32.totalorder %v386, %v387
    %v389 = vsel %vm388, %v386, %v387
    %v390 = vrot.slane %v389, 2
    %vm391 = vcmp.lt.s32.totalorder %v389, %v390
    %v392 = vsel %vm391, %v389, %v390
    %v393 = vrot.slane %v392, 1
    %vm394 = vcmp.lt.s32.totalorder %v392, %v393
    %v395 = vsel %vm394, %v392, %v393
    %vm396 = vcmp.lt.s32.totalorder %v376, %v381
    %v397 = vsel %vm396, %v376, %v381
    %v398 = vrot.slane %v397, 4
    %vm399 = vcmp.lt.s32.totalorder %v397, %v398
    %v400 = vsel %vm399, %v397, %v398
    %v401 = vrot.slane %v400, 2
    %vm402 = vcmp.lt.s32.totalorder %v400, %v401
    %v403 = vsel %vm402, %v400, %v401
    %v404 = vrot.slane %v403, 1
    %vm405 = vcmp.lt.s32.totalorder %v403, %v404
    %v406 = vsel %vm405, %v403, %v404
    %vm407 = vcmp.lt.s32.totalorder %v377, %v382
    %v408 = vsel %vm407, %v377, %v382
    %v409 = vrot.slane %v408, 4
    %vm410 = vcmp.lt.s32.totalorder %v408, %v409
    %v411 = vsel %vm410, %v408, %v409
    %v412 = vrot.slane %v411, 2
    %vm413 = vcmp.lt.s32.totalorder %v411, %v412
    %v414 = vsel %vm413, %v411, %v412
    %v415 = vrot.slane %v414, 1
    %vm416 = vcmp.lt.s32.totalorder %v414, %v415
    %v417 = vsel %vm416, %v414, %v415
    %vm418 = vcmp.lt.s32.totalorder %v378, %v383
    %v419 = vsel %vm418, %v378, %v383
    %v420 = vrot.slane %v419, 4
    %vm421 = vcmp.lt.s32.totalorder %v419, %v420
    %v422 = vsel %vm421, %v419, %v420
    %v423 = vrot.slane %v422, 2
    %vm424 = vcmp.lt.s32.totalorder %v422, %v423
    %v425 = vsel %vm424, %v422, %v423
    %v426 = vrot.slane %v425, 1
    %vm427 = vcmp.lt.s32.totalorder %v425, %v426
    %v428 = vsel %vm427, %v425, %v426
    %vm429 = vcmp.lt.s32.totalorder %v379, %v384
    %v430 = vsel %vm429, %v379, %v384
    %v431 = vrot.slane %v430, 4
    %vm432 = vcmp.lt.s32.totalorder %v430, %v431
    %v433 = vsel %vm432, %v430, %v431
    %v434 = vrot.slane %v433, 2
    %vm435 = vcmp.lt.s32.totalorder %v433, %v434
    %v436 = vsel %vm435, %v433, %v434
    %v437 = vrot.slane %v436, 1
    %vm438 = vcmp.lt.s32.totalorder %v436, %v437
    %v439 = vsel %vm438, %v436, %v437
    %v440 = vld [vmem:[%s1] sm:$0x1f]
    %v441 = vlaneseq
    %v442 = vshrl.u32 %v441, 7
    %v443 = vsub.s32 0, %v442
    %v444 = vrot.slane %v440, %v443
    %v445 = vlaneseq
    %v446 = vshrl.u32 %v445, 7
    %v447 = vsub.s32 1, %v446
    %v448 = vrot.slane %v440, %v447
    %v449 = vlaneseq
    %v450 = vshrl.u32 %v449, 7
    %v451 = vsub.s32 2, %v450
    %v452 = vrot.slane %v440, %v451
    %v453 = vlaneseq
    %v454 = vshrl.u32 %v453, 7
    %v455 = vsub.s32 3, %v454
    %v456 = vrot.slane %v440, %v455
    %v457 = vlaneseq
    %v458 = vshrl.u32 %v457, 7
    %v459 = vsub.s32 4, %v458
    %v460 = vrot.slane %v440, %v459
    %vm461 = vcmp.eq.s32.totalorder %v395, %v444
    %vm462 = vcmp.eq.s32.totalorder %v406, %v448
    %vm463 = vcmp.eq.s32.totalorder %v417, %v452
    %vm464 = vcmp.eq.s32.totalorder %v428, %v456
    %vm465 = vcmp.eq.s32.totalorder %v439, %v460
    %v466 = vsel %vm461, 1, 0
    %v467 = vsel %vm462, 1, 0
    %v468 = vsel %vm463, 1, 0
    %v469 = vsel %vm464, 1, 0
    %v470 = vsel %vm465, 1, 0
    %v471 = vcvt.s32.f32 %v466
    %v472 = vcvt.s32.f32 %v467
    %v473 = vcvt.s32.f32 %v468
    %v474 = vcvt.s32.f32 %v469
    %v475 = vcvt.s32.f32 %v470
    %v481 = vcombine.low %v353, %v355
    %v482 = vcombine.low %v357, %v359
    %v484 = vunpack.c.l.s4 1966171168
    %v485 = vunpack.c.0.s8 %v484
    %v486 = vlaneseq
    %v487 = vshrl.u32 %v486, 7
    %v488 = vsub.s32 %v485, %v487
    %v489 = vrot.slane %v481, %v488
    %v491 = vunpack.c.l.s4 1966171168
    %v492 = vunpack.c.0.s8 %v491
    %v493 = vlaneseq
    %v494 = vshrl.u32 %v493, 7
    %v495 = vsub.s32 %v492, %v494
    %v496 = vrot.slane %v482, %v495
    %v498 = vunpack.c.l.s4 1966171168
    %v499 = vunpack.c.0.s8 %v498
    %v500 = vlaneseq
    %v501 = vshrl.u32 %v500, 7
    %v502 = vsub.s32 %v499, %v501
    %v503 = vrot.slane %v361, %v502
    %v504 = vcombine.low %v489, %v496
    %v506 = vunpack.c.l.s4 1966171168
    %v507 = vunpack.c.0.s8 %v506
    %v508 = vlaneseq
    %v509 = vshrl.u32 %v508, 7
    %v510 = vsub.s32 %v507, %v509
    %v511 = vrot.slane %v504, %v510
    %v513 = vunpack.c.l.s4 1966171168
    %v514 = vunpack.c.0.s8 %v513
    %v515 = vlaneseq
    %v516 = vshrl.u32 %v515, 7
    %v517 = vsub.s32 %v514, %v516
    %v518 = vrot.slane %v503, %v517
    %v519 = vcombine.low %v511, %v518
    %v521 = vlaneseq
    %vm522 = vcmp.ge.s32.totalorder %v521, 0
    %vm523 = vcmp.lt.s32.totalorder %v521, 640
    %vm524 = vmand %vm522, %vm523
    %525 = vst.msk [vmem:[#allocation2] ss:$2 sm:$0x1f] %vm524, %v519
    %v531 = vcombine.low %v471, %v472
    %v532 = vcombine.low %v473, %v474
    %v534 = vunpack.c.l.s4 1966171168
    %v535 = vunpack.c.0.s8 %v534
    %v536 = vlaneseq
    %v537 = vshrl.u32 %v536, 7
    %v538 = vsub.s32 %v535, %v537
    %v539 = vrot.slane %v531, %v538
    %v541 = vunpack.c.l.s4 1966171168
    %v542 = vunpack.c.0.s8 %v541
    %v543 = vlaneseq
    %v544 = vshrl.u32 %v543, 7
    %v545 = vsub.s32 %v542, %v544
    %v546 = vrot.slane %v532, %v545
    %v548 = vunpack.c.l.s4 1966171168
    %v549 = vunpack.c.0.s8 %v548
    %v550 = vlaneseq
    %v551 = vshrl.u32 %v550, 7
    %v552 = vsub.s32 %v549, %v551
    %v553 = vrot.slane %v475, %v552
    %v554 = vcombine.low %v539, %v546
    %v556 = vunpack.c.l.s4 1966171168
    %v557 = vunpack.c.0.s8 %v556
    %v558 = vlaneseq
    %v559 = vshrl.u32 %v558, 7
    %v560 = vsub.s32 %v557, %v559
    %v561 = vrot.slane %v554, %v560
    %v563 = vunpack.c.l.s4 1966171168
    %v564 = vunpack.c.0.s8 %v563
    %v565 = vlaneseq
    %v566 = vshrl.u32 %v565, 7
    %v567 = vsub.s32 %v564, %v566
    %v568 = vrot.slane %v553, %v567
    %v569 = vcombine.low %v561, %v568
    %s571 = scalar_lea.vmem [#allocation2], 1
    %572 = vst.msk [vmem:[%s571] ss:$2 sm:$0x1f] %vm524, %v569
    // Predicated region
    $region10: #{tpu_custom_call.1} parent=1 // pred_check
      _
    $region11: #{tpu_custom_call.1} parent=1 // pred_check_branch
      %574 = sbr.rel (0) target = $region13
    $region12: #{tpu_custom_call.1} parent=1 // pred_region
      %s576 = ssub.s32 160, 160
      %577 = vsyncadd [#allocation3], %s576
      %s579 = sshll.u32 [#allocation2], 4
      %s580 = int_to_ptr.vmem [resolvable:$true] %s579
      %582 = dma.vmem_to_hbm [thread:$0]  %s580, 160, %s2, [#allocation3]
    $region13: #{tpu_custom_call.1} parent=1 // pred_fallthru
      _
    // Predicated region
    $region14: #{tpu_custom_call.1} parent=1 // pred_check
      _
    $region15: #{tpu_custom_call.1} parent=1 // pred_check_branch
      %584 = sbr.rel (0) target = $region17
    $region16: #{tpu_custom_call.1} parent=1 // pred_region
      %585 = dma.done [#allocation3], 160
    $region17: #{tpu_custom_call.1} parent=1 // pred_fallthru
      _
    %586 = vsyncpa [#allocation3], 1

</llo_original>
